<compile_context>
chip_gen: v6e
topology: v6e:2x2x1
jax: 0.10.0
libtpu: 0.0.40
codegen_flags: <defaults>
</compile_context>

<pallas_src>
import functools

import jax
import jax.numpy as jnp
from jax import lax
from jax.experimental import pallas as pl
from jax.experimental.pallas import tpu as pltpu


def _round_up(x: int, m: int) -> int:
    return (x + m - 1) // m * m


def _cdiv(a: int, b: int) -> int:
    return -(-a // b)


def _tpu_generation():
    try:
        kind = jax.devices()[0].device_kind.lower()
    except Exception:
        return None
    for g in ("v7", "v6", "v5p", "v5", "v4"):
        if g in kind:
            return g
    return None


def _default_vmem_limit_bytes(gen):
    # Prefer the runtime query when available; fall back per generation.
    try:
        cap = int(pltpu.get_tpu_info().vmem_capacity_bytes)
        return min(int(0.80 * cap), 112 * 1024 * 1024)
    except Exception:
        pass
    if gen == "v7":
        return 52 * 1024 * 1024          # 64 MiB per TensorCore physical
    if gen in ("v5", "v6"):
        return 100 * 1024 * 1024         # 128 MiB physical
    return 64 * 1024 * 1024              # unknown chip: conservative


def _choose_cout_block(cout_p: int) -> int:
    if cout_p <= 512:
        return cout_p
    for blk in (512, 256, 128):
        if cout_p % blk == 0:
            return blk
    return cout_p


def _choose_tile_h(H, w_pad, wp, p, cin_p, cout_p, cout_blk, act_bytes,
                   dw_bytes, out_bytes, vmem_limit_bytes):
    """Largest row tile (multiple of 2p) whose pipelined footprint fits the
    VMEM budget, rebalanced so h_pad ~= H (no padded-row waste when H is not
    a multiple of the tile)."""
    budget = int(0.70 * vmem_limit_bytes)   # double buffering counted below
    cap = _round_up(H, 2 * p)
    best = 2 * p
    for th in range(2 * p, cap + 1, 2 * p):
        in_b = 2 * (th + 2 * p) * wp * cin_p * act_bytes          # core + halo
        out_b = 2 * th * w_pad * cout_p * out_bytes                # output
        tmp_b = ((2 * th + 2 * p) * wp * cin_p * dw_bytes          # relu'd x + acc
                 + th * w_pad * cin_p * (dw_bytes + (2 if dw_bytes == 4 else 0))
                 + th * w_pad * cout_blk * 4)                      # matmul result
        w_b = 2 * (9 * cin_p * dw_bytes + cin_p * cout_p * 2 + cout_p * 4)
        if in_b + out_b + tmp_b + w_b <= budget:
            best = th
    # NOTE: if even th = 2p does not fit the budget we still return 2p; the
    # Cout-blocked matmul keeps temporaries small in that regime.
    n_tiles = _cdiv(H, best)
    return min(best, _round_up(_cdiv(H, n_tiles), 2 * p))


def _sepconv_kernel(x_ref, halo_ref, wdw_ref, wpw_ref, bias_ref, o_ref, *,
                    dilation: int, cout_blk: int, dw_dtype):
    """One (batch, row-tile) per grid step.

    x_ref    : (1, TH, Wp, Cin_p)   bf16 core rows of the padded NHWC input
    halo_ref : (1, 2p, Wp, Cin_p)   bf16 next 2p rows (bottom halo)
    wdw_ref  : (3, 3, 1, Cin_p)     depthwise weights, BN_d scale folded
    wpw_ref  : (Cin_p, Cout_p)      pointwise weights, BN_p scale folded (bf16)
    bias_ref : (1, Cout_p)          folded bias (f32)
    o_ref    : (1, TH, W_pad, Cout_p)
    """
    d = dilation
    th = x_ref.shape[1]
    w_out = o_ref.shape[2]
    cin = x_ref.shape[3]
    cout = o_ref.shape[3]

    # ReLU first (zero spatial/channel padding commutes with ReLU).
    core = jnp.maximum(x_ref[0], 0).astype(dw_dtype)      # (TH, Wp, Cin_p)
    halo = jnp.maximum(halo_ref[0], 0).astype(dw_dtype)   # (2p, Wp, Cin_p)
    x = jnp.concatenate([core, halo], axis=0)             # (TH + 2p, Wp, Cin_p)

    # Depthwise 3x3 (groups == Cin).  kh taps are leading-dim slices (cheap);
    # kw taps accumulate at full padded width so only 2 of the 9 taps need a
    # width-shifted slice.  First tap seeds each accumulator (no zeros init).
    dw = None
    for kw in range(3):
        acc = x[0:th] * wdw_ref[0, kw]                     # kh = 0 seed
        for kh in range(1, 3):
            acc = acc + x[kh * d:kh * d + th] * wdw_ref[kh, kw]
        tap = acc[:, kw * d:kw * d + w_out, :]             # (TH, W_pad, Cin_p)
        dw = tap if dw is None else dw + tap

    # Pointwise 1x1 conv with BN_point folded: bf16 MXU, f32 accumulation,
    # blocked over Cout.  W_pad is a multiple of 8 so the reshapes are free.
    dw2 = dw.reshape(th * w_out, cin).astype(jnp.bfloat16)
    for jb in range(cout // cout_blk):
        sl = slice(jb * cout_blk, (jb + 1) * cout_blk)
        y = jnp.dot(dw2, wpw_ref[:, sl], preferred_element_type=jnp.float32)
        y = y + bias_ref[:, sl]
        o_ref[0, :, :, sl] = y.reshape(th, w_out, cout_blk).astype(o_ref.dtype)


def separable_conv2d(x_nchw, w_dw, w_pw, bn_d, bn_p, *, dilation=1,
                     tile_h=None, vmem_limit_bytes=None, out_dtype=jnp.float32):
    """Fused SeparableConv2d (relu_first=True, stride=1, eval-mode BN).

    x_nchw : (N, Cin, H, W) float32
    w_dw   : (Cin, 1, 3, 3)    depthwise weight (PyTorch layout)
    w_pw   : (Cout, Cin, 1, 1) pointwise weight (PyTorch layout)
    bn_d / bn_p : dicts with gamma, beta, mean, var, eps
    Returns (N, Cout, H, W) in out_dtype (default float32).
    """
    N, Cin, H, W = x_nchw.shape
    Cout = w_pw.shape[0]
    p = dilation

    gen = _tpu_generation()
    if vmem_limit_bytes is None:
        vmem_limit_bytes = _default_vmem_limit_bytes(gen)
    # bf16 depthwise on chips with a native-bf16 VPU (v6e / v7x); f32 on v5e.
    dw_dtype = jnp.bfloat16 if gen in ("v6", "v7") else jnp.float32

    LANE = 128
    cin_p = _round_up(Cin, LANE)                # lane-dense matmul / stores
    cout_p = _round_up(Cout, LANE)
    cout_blk = _choose_cout_block(cout_p)
    w_pad = _round_up(W, 8)                     # reshape-free, unmasked output
    wp = _round_up(w_pad + 2 * p, 8)            # sublane-aligned padded width

    act_bytes = 2                               # bf16 activations in HBM
    dw_bytes = 2 if dw_dtype == jnp.bfloat16 else 4
    out_bytes = jnp.dtype(out_dtype).itemsize

    tile = tile_h if tile_h is not None else _choose_tile_h(
        H, w_pad, wp, p, cin_p, cout_p, cout_blk, act_bytes, dw_bytes,
        out_bytes, vmem_limit_bytes)
    if tile % (2 * p) != 0:
        raise ValueError(f"tile_h={tile} must be a multiple of 2*dilation={2 * p}")
    h_tiles = _cdiv(H, tile)
    h_pad = h_tiles * tile

    # ---- glue: layout + parameter folding (plain JAX) ----
    # NOTE: in a full network keep activations NHWC bf16 (channel-padded)
    # between layers so these transposes/pads drop off the HBM path.
    x = jnp.transpose(x_nchw, (0, 2, 3, 1)).astype(jnp.bfloat16)    # NHWC bf16
    x = jnp.pad(x, ((0, 0),
                    (p, p + h_pad - H),          # conv pad + tile rounding
                    (p, wp - W - p),             # conv pad + width rounding
                    (0, cin_p - Cin)))           # lane rounding

    def fold_bn(bn):
        scale = bn["gamma"] / jnp.sqrt(bn["var"] + bn["eps"])
        bias = bn["beta"] - bn["mean"] * scale
        return scale.astype(jnp.float32), bias.astype(jnp.float32)

    sd, bd = fold_bn(bn_d)   # (Cin,)
    sp, bp = fold_bn(bn_p)   # (Cout,)

    # Fold BN_depth's scale into the depthwise weight (better numerics than
    # folding it into the bf16 pointwise weight), and BN_point into the
    # pointwise weight + a single bias:
    #   ((dw*sd + bd) @ wpw)*sp + bp
    #     == DW_{w*sd}(x) @ (wpw*sp) + (bd @ (wpw*sp) + bp)
    wdw = jnp.transpose(w_dw[:, 0, :, :], (1, 2, 0)).astype(jnp.float32)  # (3,3,Cin)
    wdw = wdw * sd[None, None, :]
    wdw = jnp.pad(wdw, ((0, 0), (0, 0), (0, cin_p - Cin)))
    wdw = wdw.reshape(3, 3, 1, cin_p).astype(dw_dtype)

    wpw = jnp.transpose(w_pw[:, :, 0, 0], (1, 0)).astype(jnp.float32)     # (Cin,Cout)
    wpw_sp = wpw * sp[None, :]
    wpw_f = jnp.pad(wpw_sp, ((0, cin_p - Cin),
                             (0, cout_p - Cout))).astype(jnp.bfloat16)
    bias_f = jnp.pad(bd @ wpw_sp + bp,
                     (0, cout_p - Cout)).reshape(1, cout_p).astype(jnp.float32)

    kernel = functools.partial(_sepconv_kernel, dilation=dilation,
                               cout_blk=cout_blk, dw_dtype=dw_dtype)
    q = tile // (2 * p)      # halo block-index multiplier

    out_nhwc = pl.pallas_call(
        kernel,
        out_shape=jax.ShapeDtypeStruct((N, h_pad, w_pad, cout_p), out_dtype),
        grid_spec=pltpu.PrefetchScalarGridSpec(
            num_scalar_prefetch=0,
            grid=(N, h_tiles),
            in_specs=[
                # core rows [h*tile, (h+1)*tile)
                pl.BlockSpec((1, tile, wp, cin_p), lambda n, h: (n, h, 0, 0)),
                # bottom halo rows [(h+1)*tile, (h+1)*tile + 2p)
                pl.BlockSpec((1, 2 * p, wp, cin_p),
                             lambda n, h: (n, (h + 1) * q, 0, 0)),
                # constant index maps -> weights stay VMEM-resident
                pl.BlockSpec((3, 3, 1, cin_p), lambda n, h: (0, 0, 0, 0)),
                pl.BlockSpec((cin_p, cout_p), lambda n, h: (0, 0)),
                pl.BlockSpec((1, cout_p), lambda n, h: (0, 0)),
            ],
            out_specs=pl.BlockSpec((1, tile, w_pad, cout_p),
                                   lambda n, h: (n, h, 0, 0)),
        ),
        compiler_params=pltpu.CompilerParams(
            dimension_semantics=("parallel", "parallel"),
            vmem_limit_bytes=vmem_limit_bytes),
    )(x, x, wdw, wpw_f, bias_f)

    out_nhwc = out_nhwc[:, :H, :W, :Cout]
    return jnp.transpose(out_nhwc, (0, 3, 1, 2))            # back to NCHW


def _reference(x_nchw, w_dw, w_pw, bn_d, bn_p, *, dilation=1):
    """Pure-JAX reference matching PyTorch eval-mode forward (all f32)."""
    Cin = x_nchw.shape[1]
    x = jnp.maximum(x_nchw, 0.0)
    x = jnp.transpose(x, (0, 2, 3, 1))                            # NHWC
    k_dw = jnp.transpose(w_dw, (2, 3, 1, 0))                      # (3,3,1,Cin)
    y = lax.conv_general_dilated(
        x, k_dw, window_strides=(1, 1),
        padding=[(dilation, dilation), (dilation, dilation)],
        rhs_dilation=(dilation, dilation),
        dimension_numbers=("NHWC", "HWIO", "NHWC"),
        feature_group_count=Cin)

    def bn(v, b):
        s = b["gamma"] / jnp.sqrt(b["var"] + b["eps"])
        return v * s + (b["beta"] - b["mean"] * s)

    y = bn(y, bn_d)
    y = jnp.einsum("nhwc,oc->nhwo", y, w_pw[:, :, 0, 0])
    y = bn(y, bn_p)
    return jnp.transpose(y, (0, 3, 1, 2))


def _make_params(key, Cin, Cout):
    ks = jax.random.split(key, 9)
    w_dw = jax.random.normal(ks[0], (Cin, 1, 3, 3), jnp.float32) * 0.2
    w_pw = jax.random.normal(ks[1], (Cout, Cin, 1, 1), jnp.float32) * 0.2
    bn_d = dict(gamma=jax.random.normal(ks[2], (Cin,)) * 0.1 + 1.0,
                beta=jax.random.normal(ks[3], (Cin,)) * 0.1,
                mean=jax.random.normal(ks[4], (Cin,)) * 0.1,
                var=jnp.abs(jax.random.normal(ks[5], (Cin,))) + 0.5,
                eps=1e-5)
    bn_p = dict(gamma=jax.random.normal(ks[6], (Cout,)) * 0.1 + 1.0,
                beta=jax.random.normal(ks[7], (Cout,)) * 0.1,
                mean=jnp.zeros((Cout,)),
                var=jnp.abs(jax.random.normal(ks[8], (Cout,))) + 0.5,
                eps=1e-5)
    return w_dw, w_pw, bn_d, bn_p


if __name__ == "__main__":
    key = jax.random.PRNGKey(0)
    k_in, k_par, k_in2, k_par2 = jax.random.split(key, 4)

    # bf16 activations in HBM (+ bf16 depthwise on v6e/v7x) -> looser tolerance
    # than a pure-f32 pipeline.
    TOL = 5e-2

    # Case 1/2: small aligned shapes, two row tiles per image (halo path),
    # dilation 1 and 2.
    N, Cin, Cout, H, W = 2, 4, 8, 16, 16
    x = jax.random.normal(k_in, (N, Cin, H, W), jnp.float32)
    w_dw, w_pw, bn_d, bn_p = _make_params(k_par, Cin, Cout)
    for dilation in (1, 2):
        out = separable_conv2d(x, w_dw, w_pw, bn_d, bn_p,
                               dilation=dilation, tile_h=8)
        out = jax.block_until_ready(out)
        ref = _reference(x, w_dw, w_pw, bn_d, bn_p, dilation=dilation)
        assert out.shape == (N, Cout, H, W)
        assert jnp.allclose(out, ref, atol=TOL, rtol=TOL), \
            f"mismatch vs reference (dilation={dilation})"

    # Case 3: odd H/W/channels, automatic tile chooser (exercises width
    # padding and the waste-aware tile rebalance).
    N2, Cin2, Cout2, H2, W2 = 1, 3, 5, 13, 11
    x2 = jax.random.normal(k_in2, (N2, Cin2, H2, W2), jnp.float32)
    w_dw2, w_pw2, bn_d2, bn_p2 = _make_params(k_par2, Cin2, Cout2)
    out2 = separable_conv2d(x2, w_dw2, w_pw2, bn_d2, bn_p2, dilation=1)
    out2 = jax.block_until_ready(out2)
    ref2 = _reference(x2, w_dw2, w_pw2, bn_d2, bn_p2, dilation=1)
    assert out2.shape == (N2, Cout2, H2, W2)
    assert jnp.allclose(out2, ref2, atol=TOL, rtol=TOL), "mismatch (odd shapes)"

    print("KERNEL_OK")
</pallas_src>

<mosaic_0001>
module attributes {stable_mosaic.version = 11 : i64} {
  func.func @_sepconv_kernel(%arg0: i32, %arg1: i32, %arg2: memref<1x8x24x128xbf16, #tpu.memory_space<vmem>>, %arg3: memref<1x2x24x128xbf16, #tpu.memory_space<vmem>>, %arg4: memref<3x3x1x128xf32, #tpu.memory_space<vmem>>, %arg5: memref<128x128xbf16, #tpu.memory_space<vmem>>, %arg6: memref<1x128xf32, #tpu.memory_space<vmem>>, %arg7: memref<1x8x16x128xf32, #tpu.memory_space<vmem>>) attributes {dimension_semantics = [#tpu.dimension_semantics<parallel>, #tpu.dimension_semantics<parallel>], iteration_bounds = array<i64: 2, 2>, scalar_prefetch = 0 : i64, scratch_operands = 0 : i64, tpu.core_type = #tpu.core_type<tc>, window_params = [{transform_indices = @transform_0, window_bounds = array<i64: 1, 8, 24, 128>}, {transform_indices = @transform_1, window_bounds = array<i64: 1, 2, 24, 128>}, {pipeline_mode = #tpu.pipeline_mode<synchronous>, transform_indices = @transform_2, window_bounds = array<i64: 3, 3, 1, 128>}, {pipeline_mode = #tpu.pipeline_mode<synchronous>, transform_indices = @transform_3, window_bounds = array<i64: 128, 128>}, {pipeline_mode = #tpu.pipeline_mode<synchronous>, transform_indices = @transform_4, window_bounds = array<i64: 1, 128>}, {transform_indices = @transform_5, window_bounds = array<i64: 1, 8, 16, 128>}]} {
    %c0 = arith.constant 0 : index
    %c0_0 = arith.constant 0 : index
    %c0_1 = arith.constant 0 : index
    %c0_2 = arith.constant 0 : index
    %0 = vector.load %arg2[%c0, %c0_0, %c0_1, %c0_2] : memref<1x8x24x128xbf16, #tpu.memory_space<vmem>>, vector<1x8x24x128xbf16>
    %1 = vector.shape_cast %0 : vector<1x8x24x128xbf16> to vector<8x24x128xbf16>
    %cst = arith.constant 0.000000e+00 : bf16
    %2 = vector.broadcast %cst : bf16 to vector<8x24x128xbf16>
    %3 = arith.maximumf %1, %2 : vector<8x24x128xbf16>
    %4 = arith.extf %3 : vector<8x24x128xbf16> to vector<8x24x128xf32>
    %c0_3 = arith.constant 0 : index
    %c0_4 = arith.constant 0 : index
    %c0_5 = arith.constant 0 : index
    %c0_6 = arith.constant 0 : index
    %5 = vector.load %arg3[%c0_3, %c0_4, %c0_5, %c0_6] : memref<1x2x24x128xbf16, #tpu.memory_space<vmem>>, vector<1x2x24x128xbf16>
    %6 = vector.shape_cast %5 : vector<1x2x24x128xbf16> to vector<2x24x128xbf16>
    %cst_7 = arith.constant 0.000000e+00 : bf16
    %7 = vector.broadcast %cst_7 : bf16 to vector<2x24x128xbf16>
    %8 = arith.maximumf %6, %7 : vector<2x24x128xbf16>
    %9 = arith.extf %8 : vector<2x24x128xbf16> to vector<2x24x128xf32>
    %10 = tpu.concatenate %4, %9 in 0 : vector<8x24x128xf32>, vector<2x24x128xf32> -> vector<10x24x128xf32>
    %11 = vector.extract_strided_slice %10 {offsets = [0, 0, 0], sizes = [8, 24, 128], strides = [1, 1, 1]} : vector<10x24x128xf32> to vector<8x24x128xf32>
    %c0_8 = arith.constant 0 : index
    %c0_9 = arith.constant 0 : index
    %c0_10 = arith.constant 0 : index
    %c0_11 = arith.constant 0 : index
    %12 = vector.load %arg4[%c0_8, %c0_9, %c0_10, %c0_11] : memref<3x3x1x128xf32, #tpu.memory_space<vmem>>, vector<1x1x1x128xf32>
    %13 = vector.shape_cast %12 : vector<1x1x1x128xf32> to vector<1x128xf32>
    %14 = vector.shape_cast %13 : vector<1x128xf32> to vector<1x1x128xf32>
    %15 = vector.broadcast %14 : vector<1x1x128xf32> to vector<8x24x128xf32>
    %16 = arith.mulf %11, %15 : vector<8x24x128xf32>
    %17 = vector.extract_strided_slice %10 {offsets = [1, 0, 0], sizes = [8, 24, 128], strides = [1, 1, 1]} : vector<10x24x128xf32> to vector<8x24x128xf32>
    %c1 = arith.constant 1 : index
    %c0_12 = arith.constant 0 : index
    %c0_13 = arith.constant 0 : index
    %c0_14 = arith.constant 0 : index
    %18 = vector.load %arg4[%c1, %c0_12, %c0_13, %c0_14] : memref<3x3x1x128xf32, #tpu.memory_space<vmem>>, vector<1x1x1x128xf32>
    %19 = vector.shape_cast %18 : vector<1x1x1x128xf32> to vector<1x128xf32>
    %20 = vector.shape_cast %19 : vector<1x128xf32> to vector<1x1x128xf32>
    %21 = vector.broadcast %20 : vector<1x1x128xf32> to vector<8x24x128xf32>
    %22 = arith.mulf %17, %21 : vector<8x24x128xf32>
    %23 = arith.addf %16, %22 : vector<8x24x128xf32>
    %24 = vector.extract_strided_slice %10 {offsets = [2, 0, 0], sizes = [8, 24, 128], strides = [1, 1, 1]} : vector<10x24x128xf32> to vector<8x24x128xf32>
    %c2 = arith.constant 2 : index
    %c0_15 = arith.constant 0 : index
    %c0_16 = arith.constant 0 : index
    %c0_17 = arith.constant 0 : index
    %25 = vector.load %arg4[%c2, %c0_15, %c0_16, %c0_17] : memref<3x3x1x128xf32, #tpu.memory_space<vmem>>, vector<1x1x1x128xf32>
    %26 = vector.shape_cast %25 : vector<1x1x1x128xf32> to vector<1x128xf32>
    %27 = vector.shape_cast %26 : vector<1x128xf32> to vector<1x1x128xf32>
    %28 = vector.broadcast %27 : vector<1x1x128xf32> to vector<8x24x128xf32>
    %29 = arith.mulf %24, %28 : vector<8x24x128xf32>
    %30 = arith.addf %23, %29 : vector<8x24x128xf32>
    %31 = vector.extract_strided_slice %30 {offsets = [0, 0, 0], sizes = [8, 16, 128], strides = [1, 1, 1]} : vector<8x24x128xf32> to vector<8x16x128xf32>
    %32 = vector.extract_strided_slice %10 {offsets = [0, 0, 0], sizes = [8, 24, 128], strides = [1, 1, 1]} : vector<10x24x128xf32> to vector<8x24x128xf32>
    %c0_18 = arith.constant 0 : index
    %c1_19 = arith.constant 1 : index
    %c0_20 = arith.constant 0 : index
    %c0_21 = arith.constant 0 : index
    %33 = vector.load %arg4[%c0_18, %c1_19, %c0_20, %c0_21] : memref<3x3x1x128xf32, #tpu.memory_space<vmem>>, vector<1x1x1x128xf32>
    %34 = vector.shape_cast %33 : vector<1x1x1x128xf32> to vector<1x128xf32>
    %35 = vector.shape_cast %34 : vector<1x128xf32> to vector<1x1x128xf32>
    %36 = vector.broadcast %35 : vector<1x1x128xf32> to vector<8x24x128xf32>
    %37 = arith.mulf %32, %36 : vector<8x24x128xf32>
    %38 = vector.extract_strided_slice %10 {offsets = [1, 0, 0], sizes = [8, 24, 128], strides = [1, 1, 1]} : vector<10x24x128xf32> to vector<8x24x128xf32>
    %c1_22 = arith.constant 1 : index
    %c1_23 = arith.constant 1 : index
    %c0_24 = arith.constant 0 : index
    %c0_25 = arith.constant 0 : index
    %39 = vector.load %arg4[%c1_22, %c1_23, %c0_24, %c0_25] : memref<3x3x1x128xf32, #tpu.memory_space<vmem>>, vector<1x1x1x128xf32>
    %40 = vector.shape_cast %39 : vector<1x1x1x128xf32> to vector<1x128xf32>
    %41 = vector.shape_cast %40 : vector<1x128xf32> to vector<1x1x128xf32>
    %42 = vector.broadcast %41 : vector<1x1x128xf32> to vector<8x24x128xf32>
    %43 = arith.mulf %38, %42 : vector<8x24x128xf32>
    %44 = arith.addf %37, %43 : vector<8x24x128xf32>
    %45 = vector.extract_strided_slice %10 {offsets = [2, 0, 0], sizes = [8, 24, 128], strides = [1, 1, 1]} : vector<10x24x128xf32> to vector<8x24x128xf32>
    %c2_26 = arith.constant 2 : index
    %c1_27 = arith.constant 1 : index
    %c0_28 = arith.constant 0 : index
    %c0_29 = arith.constant 0 : index
    %46 = vector.load %arg4[%c2_26, %c1_27, %c0_28, %c0_29] : memref<3x3x1x128xf32, #tpu.memory_space<vmem>>, vector<1x1x1x128xf32>
    %47 = vector.shape_cast %46 : vector<1x1x1x128xf32> to vector<1x128xf32>
    %48 = vector.shape_cast %47 : vector<1x128xf32> to vector<1x1x128xf32>
    %49 = vector.broadcast %48 : vector<1x1x128xf32> to vector<8x24x128xf32>
    %50 = arith.mulf %45, %49 : vector<8x24x128xf32>
    %51 = arith.addf %44, %50 : vector<8x24x128xf32>
    %52 = vector.extract_strided_slice %51 {offsets = [0, 1, 0], sizes = [8, 16, 128], strides = [1, 1, 1]} : vector<8x24x128xf32> to vector<8x16x128xf32>
    %53 = arith.addf %31, %52 : vector<8x16x128xf32>
    %54 = vector.extract_strided_slice %10 {offsets = [0, 0, 0], sizes = [8, 24, 128], strides = [1, 1, 1]} : vector<10x24x128xf32> to vector<8x24x128xf32>
    %c0_30 = arith.constant 0 : index
    %c2_31 = arith.constant 2 : index
    %c0_32 = arith.constant 0 : index
    %c0_33 = arith.constant 0 : index
    %55 = vector.load %arg4[%c0_30, %c2_31, %c0_32, %c0_33] : memref<3x3x1x128xf32, #tpu.memory_space<vmem>>, vector<1x1x1x128xf32>
    %56 = vector.shape_cast %55 : vector<1x1x1x128xf32> to vector<1x128xf32>
    %57 = vector.shape_cast %56 : vector<1x128xf32> to vector<1x1x128xf32>
    %58 = vector.broadcast %57 : vector<1x1x128xf32> to vector<8x24x128xf32>
    %59 = arith.mulf %54, %58 : vector<8x24x128xf32>
    %60 = vector.extract_strided_slice %10 {offsets = [1, 0, 0], sizes = [8, 24, 128], strides = [1, 1, 1]} : vector<10x24x128xf32> to vector<8x24x128xf32>
    %c1_34 = arith.constant 1 : index
    %c2_35 = arith.constant 2 : index
    %c0_36 = arith.constant 0 : index
    %c0_37 = arith.constant 0 : index
    %61 = vector.load %arg4[%c1_34, %c2_35, %c0_36, %c0_37] : memref<3x3x1x128xf32, #tpu.memory_space<vmem>>, vector<1x1x1x128xf32>
    %62 = vector.shape_cast %61 : vector<1x1x1x128xf32> to vector<1x128xf32>
    %63 = vector.shape_cast %62 : vector<1x128xf32> to vector<1x1x128xf32>
    %64 = vector.broadcast %63 : vector<1x1x128xf32> to vector<8x24x128xf32>
    %65 = arith.mulf %60, %64 : vector<8x24x128xf32>
    %66 = arith.addf %59, %65 : vector<8x24x128xf32>
    %67 = vector.extract_strided_slice %10 {offsets = [2, 0, 0], sizes = [8, 24, 128], strides = [1, 1, 1]} : vector<10x24x128xf32> to vector<8x24x128xf32>
    %c2_38 = arith.constant 2 : index
    %c2_39 = arith.constant 2 : index
    %c0_40 = arith.constant 0 : index
    %c0_41 = arith.constant 0 : index
    %68 = vector.load %arg4[%c2_38, %c2_39, %c0_40, %c0_41] : memref<3x3x1x128xf32, #tpu.memory_space<vmem>>, vector<1x1x1x128xf32>
    %69 = vector.shape_cast %68 : vector<1x1x1x128xf32> to vector<1x128xf32>
    %70 = vector.shape_cast %69 : vector<1x128xf32> to vector<1x1x128xf32>
    %71 = vector.broadcast %70 : vector<1x1x128xf32> to vector<8x24x128xf32>
    %72 = arith.mulf %67, %71 : vector<8x24x128xf32>
    %73 = arith.addf %66, %72 : vector<8x24x128xf32>
    %74 = vector.extract_strided_slice %73 {offsets = [0, 2, 0], sizes = [8, 16, 128], strides = [1, 1, 1]} : vector<8x24x128xf32> to vector<8x16x128xf32>
    %75 = arith.addf %53, %74 : vector<8x16x128xf32>
    %76 = vector.shape_cast %75 : vector<8x16x128xf32> to vector<128x128xf32>
    %77 = arith.truncf %76 : vector<128x128xf32> to vector<128x128xbf16>
    %c0_42 = arith.constant 0 : index
    %c0_43 = arith.constant 0 : index
    %78 = vector.load %arg5[%c0_42, %c0_43] : memref<128x128xbf16, #tpu.memory_space<vmem>>, vector<128x128xbf16>
    %cst_44 = arith.constant dense<0.000000e+00> : vector<128x128xf32>
    %79 = tpu.matmul %77, %78, %cst_44 {dimension_numbers = #tpu.dot_dimension_numbers<[1], [0], [0], [1], [0, 0, 1, 1], [], []>} : vector<128x128xbf16>, vector<128x128xbf16>, vector<128x128xf32> -> vector<128x128xf32>
    %c0_45 = arith.constant 0 : index
    %c0_46 = arith.constant 0 : index
    %80 = vector.load %arg6[%c0_45, %c0_46] : memref<1x128xf32, #tpu.memory_space<vmem>>, vector<1x128xf32>
    %81 = vector.broadcast %80 : vector<1x128xf32> to vector<128x128xf32>
    %82 = arith.addf %79, %81 : vector<128x128xf32>
    %83 = vector.shape_cast %82 : vector<128x128xf32> to vector<8x16x128xf32>
    %c0_47 = arith.constant 0 : index
    %c0_48 = arith.constant 0 : index
    %c0_49 = arith.constant 0 : index
    %c0_50 = arith.constant 0 : index
    %84 = vector.load %arg7[%c0_47, %c0_48, %c0_49, %c0_50] : memref<1x8x16x128xf32, #tpu.memory_space<vmem>>, vector<1x8x16x128xf32>
    %85 = vector.shape_cast %84 : vector<1x8x16x128xf32> to vector<8x16x128xf32>
    %86 = vector.shape_cast %83 : vector<8x16x128xf32> to vector<1x8x16x128xf32>
    tpu.vector_store %arg7[%c0_47, %c0_48, %c0_49, %c0_50], %86 {strides = array<i32>} : memref<1x8x16x128xf32, #tpu.memory_space<vmem>>, vector<1x8x16x128xf32>,
    return
  }
  func.func @transform_0(%arg0: i32, %arg1: i32) -> (i32, i32, i32, i32) {
    %c0_i32 = arith.constant 0 : i32
    %c0_i32_0 = arith.constant 0 : i32
    %c0_i32_1 = arith.constant 0 : i32
    return %arg0, %arg1, %c0_i32, %c0_i32_0 : i32, i32, i32, i32
  }
  func.func @transform_1(%arg0: i32, %arg1: i32) -> (i32, i32, i32, i32) {
    %c1_i32 = arith.constant 1 : i32
    %0 = arith.addi %arg1, %c1_i32 : i32
    %c4_i32 = arith.constant 4 : i32
    %1 = arith.muli %0, %c4_i32 : i32
    %c0_i32 = arith.constant 0 : i32
    %c0_i32_0 = arith.constant 0 : i32
    %c0_i32_1 = arith.constant 0 : i32
    return %arg0, %1, %c0_i32, %c0_i32_0 : i32, i32, i32, i32
  }
  func.func @transform_2(%arg0: i32, %arg1: i32) -> (i32, i32, i32, i32) {
    %c0_i32 = arith.constant 0 : i32
    %c0_i32_0 = arith.constant 0 : i32
    %c0_i32_1 = arith.constant 0 : i32
    %c0_i32_2 = arith.constant 0 : i32
    %c0_i32_3 = arith.constant 0 : i32
    return %c0_i32, %c0_i32_0, %c0_i32_1, %c0_i32_2 : i32, i32, i32, i32
  }
  func.func @transform_3(%arg0: i32, %arg1: i32) -> (i32, i32) {
    %c0_i32 = arith.constant 0 : i32
    %c0_i32_0 = arith.constant 0 : i32
    %c0_i32_1 = arith.constant 0 : i32
    return %c0_i32, %c0_i32_0 : i32, i32
  }
  func.func @transform_4(%arg0: i32, %arg1: i32) -> (i32, i32) {
    %c0_i32 = arith.constant 0 : i32
    %c0_i32_0 = arith.constant 0 : i32
    %c0_i32_1 = arith.constant 0 : i32
    return %c0_i32, %c0_i32_0 : i32, i32
  }
  func.func @transform_5(%arg0: i32, %arg1: i32) -> (i32, i32, i32, i32) {
    %c0_i32 = arith.constant 0 : i32
    %c0_i32_0 = arith.constant 0 : i32
    %c0_i32_1 = arith.constant 0 : i32
    return %arg0, %arg1, %c0_i32, %c0_i32_0 : i32, i32, i32, i32
  }
}

</mosaic_0001>

<llo_original>
// kernel: tpu_custom_call.1
$region0: #{tpu_custom_call.1}
  #allocation0 [shape = 'u32[]', space=smem, size = 0x4, offset = 0x4, fixed_abs, tag = 'smem constant byte address 0x4 - core index']
  #allocation1 [shape = 'u32[144,128]{1,0:T(1,128)}', space=vmem, size = 0x12000, scoped, tag = 'internal scratch']
  %s0 = inlined_call_operand.hbm [shape: bf16[2,18,24,128], index: 0, kind: input, shape index: {}]
  %s1 = inlined_call_operand.hbm [shape: bf16[2,18,24,128], index: 1, kind: input, shape index: {}]
  %s2 = inlined_call_operand.hbm [shape: f32[3,3,1,128], index: 2, kind: input, shape index: {}]
  %s3 = inlined_call_operand.hbm [shape: bf16[128,128], index: 3, kind: input, shape index: {}]
  %s4 = inlined_call_operand.vmem [shape: f32[1,128], index: 4, kind: input, shape index: {}]
  %s5 = inlined_call_operand.hbm [shape: f32[2,16,16,128], index: 5, kind: output, shape index: {}]
  %s6 = sld [smem:[#allocation0]]
  $region69: #{tpu_custom_call.1} parent=0
    _
  %s8 = ssub.s32 1, %s6
  %s9 = scalar_select 0, %s8, %s6
  $region1: #{tpu_custom_call.1} parent=0
    #allocation2 [shape = 'u8[98304]{0}', space=vmem, size = 0x18000, scoped, tag = 'input window, operand 0']
    #allocation3 [shape = 's32[2]{0}', space=sflag, size = 0x8, scoped, tag = 'scoped memory for tpu_custom_call.1']
    #allocation4 [shape = 's32[2]{0}', space=sflag, size = 0x8, scoped, tag = 'scoped memory for tpu_custom_call.1']
    #allocation5 [shape = 'u8[24576]{0}', space=vmem, size = 0x6000, scoped, tag = 'input window, operand 1']
    #allocation6 [shape = 's32[2]{0}', space=sflag, size = 0x8, scoped, tag = 'scoped memory for tpu_custom_call.1']
    #allocation7 [shape = 'u8[4608]{0}', space=vmem, size = 0x1400, scoped, tag = 'input window, operand 2, single buffered']
    #allocation8 [shape = 'u8[32768]{0}', space=vmem, size = 0x8000, scoped, tag = 'input window, operand 3, single buffered']
    #allocation9 [shape = 's32[1]{0}', space=sflag, size = 0x4, scoped, tag = 'scoped memory for tpu_custom_call.1']
    #allocation10 [shape = 'u8[131072]{0}', space=vmem, size = 0x20000, scoped, tag = 'output window, operand 0']
    %10 = vsyncpa [#allocation3], 0
    %s11 = scalar_lea.sflag [#allocation3], 1
    %12 = vsyncpa %s11, 0
    %13 = vsyncpa [#allocation6], 0
    %s14 = scalar_lea.sflag [#allocation6], 1
    %15 = vsyncpa %s14, 0
    %16 = vsyncpa [#allocation9], 0
    %17 = vsyncpa [#allocation4], 0
    %s18 = scalar_lea.sflag [#allocation4], 1
    %19 = vsyncpa %s18, 0
    loop: start=0, step=1, limit=6
    $region2: #{tpu_custom_call.1} parent=1 // loop_pre_header
      _
    $region3: #{tpu_custom_call.1} parent=1 // loop_header
      %s21 = sphi 0, %s25
      %p22 = scmp.ge.s32.totalorder %s21, 6
      %s28 = sphi 0, %s40
      %s29 = sphi 0, %s36
      %s30 = sphi 0, %s28
      %s31 = sphi 0, %s29
      %s32 = sphi 0, %s30
      %s33 = sphi 0, %s31
      %s45 = sphi 0, %s47
      %s48 = sphi 0, %s45
      %s49 = sphi 0, %s48
      %s65 = sphi 0, %s49
      %s77 = sphi 0, %s79
      %s80 = sphi 0, %s77
      %s81 = sphi 0, %s80
      %s97 = sphi 0, %s81
      %s101 = sphi 0, %s101
      %s103 = sphi 0, %s101
      %s104 = sphi 0, %s103
      %s118 = sphi 0, %s104
      %s122 = sphi 0, %s122
      %s124 = sphi 0, %s122
      %s125 = sphi 0, %s124
      %s139 = sphi 0, %s125
      %s143 = sphi 0, %s143
      %s145 = sphi 0, %s143
      %s146 = sphi 0, %s145
      %s160 = sphi 0, %s146
      %s168 = sphi 0, %s170
      %s171 = sphi 0, %s168
      %s172 = sphi 0, %s171
      %s188 = sphi 0, %s172
    $region4: #{tpu_custom_call.1} parent=1 // loop_header_branch
      %24 = sbr.rel (%p22) target = $region8
    $region5: #{tpu_custom_call.1} parent=1 // loop_body
      %s26 = ssub.s32 %s21, 1
      %s27 = ssub.s32 %s21, 2
      %s34 = sadd.s32 1, %s29
      %p35 = scmp.ge.s32.totalorder %s34, 2
      %s36 = scalar_select %p35, 0, %s34
      %s37 = sadd.s32 1, %s28
      %s38 = scalar_select %p35, %s37, %s28
      %p39 = scmp.ge.s32.totalorder %s38, 2
      %s40 = scalar_select %p39, 0, %s38
      %s41 = ssub.s32 %s28, %s40
      %s42 = ssub.s32 %s29, %s36
      %s43 = sor.u32 %s41, %s42
      %p44 = scmp.eq.s32.totalorder %s43, 0
      %s46 = sadd.s32 %s45, 1
      %s47 = scalar_select %p44, %s45, %s46
      %p50 = pneg %p44
      %p51 = scmp.eq.s32.totalorder %s21, 3
      %p52 = por %p50, %p51
      %p53 = scmp.ne.s32.totalorder %s45, %s48
      %p54 = scmp.eq.s32.totalorder %s21, 0
      %p55 = por %p53, %p54
      %p56 = scmp.ne.s32.totalorder %s45, %s48
      %p57 = scmp.eq.s32.totalorder %s26, 3
      %p58 = por %p56, %p57
      %p59 = scmp.ne.s32.totalorder %s48, %s49
      %p60 = scmp.eq.s32.totalorder %s26, 0
      %p61 = por %p59, %p60
      %p62 = scmp.ne.s32.totalorder %s48, %s49
      %p63 = scmp.eq.s32.totalorder %s27, 3
      %p64 = por %p62, %p63
      %p66 = scmp.ne.s32.totalorder %s49, %s65
      %p67 = scmp.eq.s32.totalorder %s27, 0
      %p68 = por %p66, %p67
      %s69 = sadd.s32 %s29, 1
      %s70 = smul.u32 %s69, 4
      %s71 = sadd.s32 %s36, 1
      %s72 = smul.u32 %s71, 4
      %s73 = ssub.s32 %s28, %s40
      %s74 = ssub.s32 %s70, %s72
      %s75 = sor.u32 %s73, %s74
      %p76 = scmp.eq.s32.totalorder %s75, 0
      %s78 = sadd.s32 %s77, 1
      %s79 = scalar_select %p76, %s77, %s78
      %p82 = pneg %p76
      %p83 = scmp.eq.s32.totalorder %s21, 3
      %p84 = por %p82, %p83
      %p85 = scmp.ne.s32.totalorder %s77, %s80
      %p86 = scmp.eq.s32.totalorder %s21, 0
      %p87 = por %p85, %p86
      %p88 = scmp.ne.s32.totalorder %s77, %s80
      %p89 = scmp.eq.s32.totalorder %s26, 3
      %p90 = por %p88, %p89
      %p91 = scmp.ne.s32.totalorder %s80, %s81
      %p92 = scmp.eq.s32.totalorder %s26, 0
      %p93 = por %p91, %p92
      %p94 = scmp.ne.s32.totalorder %s80, %s81
      %p95 = scmp.eq.s32.totalorder %s27, 3
      %p96 = por %p94, %p95
      %p98 = scmp.ne.s32.totalorder %s81, %s97
      %p99 = scmp.eq.s32.totalorder %s27, 0
      %p100 = por %p98, %p99
      %s102 = sadd.s32 %s101, 1
      %p105 = scmp.eq.s32.totalorder %s21, 3
      %p106 = scmp.ne.s32.totalorder %s101, %s103
      %p107 = scmp.eq.s32.totalorder %s21, 0
      %p108 = por %p106, %p107
      %p109 = scmp.ne.s32.totalorder %s101, %s103
      %p110 = scmp.eq.s32.totalorder %s26, 3
      %p111 = por %p109, %p110
      %p112 = scmp.ne.s32.totalorder %s103, %s104
      %p113 = scmp.eq.s32.totalorder %s26, 0
      %p114 = por %p112, %p113
      %p115 = scmp.ne.s32.totalorder %s103, %s104
      %p116 = scmp.eq.s32.totalorder %s27, 3
      %p117 = por %p115, %p116
      %p119 = scmp.ne.s32.totalorder %s104, %s118
      %p120 = scmp.eq.s32.totalorder %s27, 0
      %p121 = por %p119, %p120
      %s123 = sadd.s32 %s122, 1
      %p126 = scmp.eq.s32.totalorder %s21, 3
      %p127 = scmp.ne.s32.totalorder %s122, %s124
      %p128 = scmp.eq.s32.totalorder %s21, 0
      %p129 = por %p127, %p128
      %p130 = scmp.ne.s32.totalorder %s122, %s124
      %p131 = scmp.eq.s32.totalorder %s26, 3
      %p132 = por %p130, %p131
      %p133 = scmp.ne.s32.totalorder %s124, %s125
      %p134 = scmp.eq.s32.totalorder %s26, 0
      %p135 = por %p133, %p134
      %p136 = scmp.ne.s32.totalorder %s124, %s125
      %p137 = scmp.eq.s32.totalorder %s27, 3
      %p138 = por %p136, %p137
      %p140 = scmp.ne.s32.totalorder %s125, %s139
      %p141 = scmp.eq.s32.totalorder %s27, 0
      %p142 = por %p140, %p141
      %s144 = sadd.s32 %s143, 1
      %p147 = scmp.eq.s32.totalorder %s21, 3
      %p148 = scmp.ne.s32.totalorder %s143, %s145
      %p149 = scmp.eq.s32.totalorder %s21, 0
      %p150 = por %p148, %p149
      %p151 = scmp.ne.s32.totalorder %s143, %s145
      %p152 = scmp.eq.s32.totalorder %s26, 3
      %p153 = por %p151, %p152
      %p154 = scmp.ne.s32.totalorder %s145, %s146
      %p155 = scmp.eq.s32.totalorder %s26, 0
      %p156 = por %p154, %p155
      %p157 = scmp.ne.s32.totalorder %s145, %s146
      %p158 = scmp.eq.s32.totalorder %s27, 3
      %p159 = por %p157, %p158
      %p161 = scmp.ne.s32.totalorder %s146, %s160
      %p162 = scmp.eq.s32.totalorder %s27, 0
      %p163 = por %p161, %p162
      %s164 = ssub.s32 %s28, %s40
      %s165 = ssub.s32 %s29, %s36
      %s166 = sor.u32 %s164, %s165
      %p167 = scmp.eq.s32.totalorder %s166, 0
      %s169 = sadd.s32 %s168, 1
      %s170 = scalar_select %p167, %s168, %s169
      %p173 = pneg %p167
      %p174 = scmp.eq.s32.totalorder %s21, 3
      %p175 = por %p173, %p174
      %p176 = scmp.ne.s32.totalorder %s168, %s171
      %p177 = scmp.eq.s32.totalorder %s21, 0
      %p178 = por %p176, %p177
      %p179 = scmp.ne.s32.totalorder %s168, %s171
      %p180 = scmp.eq.s32.totalorder %s26, 3
      %p181 = por %p179, %p180
      %p182 = scmp.ne.s32.totalorder %s171, %s172
      %p183 = scmp.eq.s32.totalorder %s26, 0
      %p184 = por %p182, %p183
      %p185 = scmp.ne.s32.totalorder %s171, %s172
      %p186 = scmp.eq.s32.totalorder %s27, 3
      %p187 = por %p185, %p186
      %p189 = scmp.ne.s32.totalorder %s172, %s188
      %p190 = scmp.eq.s32.totalorder %s27, 0
      %p191 = por %p189, %p190
      %p192 = scmp.le.s32.totalorder 1, %s21
      %p193 = scmp.lt.s32.totalorder %s21, 5
      %p194 = pnand %p192, %p193
      %p195 = pneg %p194
      // Predicated region
      $region9: #{tpu_custom_call.1} parent=5 // pred_check
        _
      $region10: #{tpu_custom_call.1} parent=5 // pred_check_branch
        %197 = sbr.rel (%p194) target = $region12
      $region11: #{tpu_custom_call.1} parent=5 // pred_region
        %s198 = ssub.s32 %s21, 1
        // Predicated region
        $region13: #{tpu_custom_call.1} parent=11 // pred_check
          %p199 = pneg %p114
        $region14: #{tpu_custom_call.1} parent=11 // pred_check_branch
          %201 = sbr.rel (%p199) target = $region16
        $region15: #{tpu_custom_call.1} parent=11 // pred_region
          %s203 = ssub.s32 144, 144
          %204 = vsyncadd [#allocation6], %s203
          %s205 = sshll.u32 [#allocation7], 4
          %s206 = int_to_ptr.vmem [resolvable:$true] %s205
          %211 = dma.hbm_to_vmem [thread:$0]  %s2, 144, %s206, [#allocation6], 16, 16, 1
        $region16: #{tpu_custom_call.1} parent=11 // pred_fallthru
          _
        // Predicated region
        $region17: #{tpu_custom_call.1} parent=11 // pred_check
          %p212 = pneg %p135
        $region18: #{tpu_custom_call.1} parent=11 // pred_check_branch
          %214 = sbr.rel (%p212) target = $region20
        $region19: #{tpu_custom_call.1} parent=11 // pred_region
          %s216 = ssub.s32 1024, 1024
          %217 = vsyncadd [#allocation9], %s216
          %s218 = sshll.u32 [#allocation8], 4
          %s219 = int_to_ptr.vmem [resolvable:$true] %s218
          %224 = dma.hbm_to_vmem [thread:$0]  %s3, 1024, %s219, [#allocation9], 64, 64, 4
        $region20: #{tpu_custom_call.1} parent=11 // pred_fallthru
          _
        // Predicated region
        $region21: #{tpu_custom_call.1} parent=11 // pred_check
          %p225 = pneg %p156
        $region22: #{tpu_custom_call.1} parent=11 // pred_check_branch
          %227 = sbr.rel (%p225) target = $region24
        $region23: #{tpu_custom_call.1} parent=11 // pred_region
          _
        $region24: #{tpu_custom_call.1} parent=11 // pred_fallthru
          _
      $region12: #{tpu_custom_call.1} parent=5 // pred_fallthru
        _
      %p228 = scmp.lt.s32.totalorder %s21, 4
      // Predicated region
      $region25: #{tpu_custom_call.1} parent=5 // pred_check
        %p229 = pneg %p228
      $region26: #{tpu_custom_call.1} parent=5 // pred_check_branch
        %231 = sbr.rel (%p229) target = $region28
      $region27: #{tpu_custom_call.1} parent=5 // pred_region
        // Predicated region
        $region29: #{tpu_custom_call.1} parent=27 // pred_check
          %p232 = pneg %p55
        $region30: #{tpu_custom_call.1} parent=27 // pred_check_branch
          %234 = sbr.rel (%p232) target = $region32
        $region31: #{tpu_custom_call.1} parent=27 // pred_region
          %s235 = sand.u32 %s45, 1
          %s236 = scalar_lea.sflag [#allocation3], %s235
          %s237 = sand.u32 %s45, 1
          %s238 = smul.addr %s237, 96
          %s239 = scalar_lea.vmem [#allocation2], %s238
          %s240 = smul.u32 8, %s29
          %s241 = ssub.s32 18, %s240
          %p242 = scmp.lt.s32.totalorder %s241, 8
          %s243 = scalar_select %p242, %s241, 8
          %s244 = smul.u32 64, %s243
          %s245 = smul.u32 %s244, 3
          %s247 = ssub.s32 1536, %s245
          %248 = vsyncadd %s236, %s247
          %p249 = scmp.ne.s32.totalorder 0, %s245
          %s250 = smul.addr %s240, 3
          %s251 = smul.addr %s28, 54
          %s252 = sadd.s32 %s250, %s251
          %s253 = smul.addr %s252, 64
          %s254 = scalar_lea.hbm %s0, %s253
          %s255 = smul.u32 %s243, 3
          %s256 = smul.u32 4, %s255
          %s257 = sshll.u32 %s239, 4
          %s258 = int_to_ptr.vmem [resolvable:$true] %s257
          %s259 = sshll.u32 %s256, 4
          %263 = dma.hbm_to_vmem [thread:$0]  (%p249), %s254, %s259, %s258, %s236, 64, 64, 4
        $region32: #{tpu_custom_call.1} parent=27 // pred_fallthru
          _
        // Predicated region
        $region33: #{tpu_custom_call.1} parent=27 // pred_check
          %p264 = pneg %p87
        $region34: #{tpu_custom_call.1} parent=27 // pred_check_branch
          %266 = sbr.rel (%p264) target = $region36
        $region35: #{tpu_custom_call.1} parent=27 // pred_region
          %s267 = sand.u32 %s21, 1
          %s268 = scalar_lea.sflag [#allocation6], %s267
          %s269 = sand.u32 %s77, 1
          %s270 = smul.addr %s269, 24
          %s271 = scalar_lea.vmem [#allocation5], %s270
          %s272 = sadd.s32 %s29, 1
          %s273 = smul.u32 %s272, 4
          %s274 = smul.u32 2, %s273
          %s276 = ssub.s32 384, 384
          %277 = vsyncadd %s268, %s276
          %s278 = smul.addr %s274, 3
          %s279 = smul.addr %s28, 54
          %s280 = sadd.s32 %s278, %s279
          %s281 = smul.addr %s280, 64
          %s282 = scalar_lea.hbm %s1, %s281
          %s283 = sshll.u32 %s271, 4
          %s284 = int_to_ptr.vmem [resolvable:$true] %s283
          %289 = dma.hbm_to_vmem [thread:$0]  %s282, 384, %s284, %s268, 64, 64, 4
        $region36: #{tpu_custom_call.1} parent=27 // pred_fallthru
          _
      $region28: #{tpu_custom_call.1} parent=5 // pred_fallthru
        _
      %p290 = scmp.le.s32.totalorder 1, %s21
      %p291 = scmp.lt.s32.totalorder %s21, 5
      %p292 = pnand %p290, %p291
      %p293 = pneg %p292
      // Predicated region
      $region37: #{tpu_custom_call.1} parent=5 // pred_check
        _
      $region38: #{tpu_custom_call.1} parent=5 // pred_check_branch
        %295 = sbr.rel (%p292) target = $region40
      $region39: #{tpu_custom_call.1} parent=5 // pred_region
        %s296 = ssub.s32 %s21, 1
        %s297 = sand.u32 %s48, 1
        %s298 = scalar_lea.sflag [#allocation3], %s297
        %s299 = sand.u32 %s48, 1
        %s300 = smul.addr %s299, 96
        %s301 = scalar_lea.vmem [#allocation2], %s300
        // Predicated region
        $region41: #{tpu_custom_call.1} parent=39 // pred_check
          %p302 = pneg %p61
        $region42: #{tpu_custom_call.1} parent=39 // pred_check_branch
          %304 = sbr.rel (%p302) target = $region44
        $region43: #{tpu_custom_call.1} parent=39 // pred_region
          %305 = dma.done %s298, 1536
        $region44: #{tpu_custom_call.1} parent=39 // pred_fallthru
          _
        %s306 = sand.u32 %s26, 1
        %s307 = scalar_lea.sflag [#allocation6], %s306
        %s308 = sand.u32 %s80, 1
        %s309 = smul.addr %s308, 24
        %s310 = scalar_lea.vmem [#allocation5], %s309
        // Predicated region
        $region45: #{tpu_custom_call.1} parent=39 // pred_check
          %p311 = pneg %p93
        $region46: #{tpu_custom_call.1} parent=39 // pred_check_branch
          %313 = sbr.rel (%p311) target = $region48
        $region47: #{tpu_custom_call.1} parent=39 // pred_region
          %314 = dma.done %s307, 384
        $region48: #{tpu_custom_call.1} parent=39 // pred_fallthru
          _
        // Predicated region
        $region49: #{tpu_custom_call.1} parent=39 // pred_check
          %p315 = pneg %p114
        $region50: #{tpu_custom_call.1} parent=39 // pred_check_branch
          %317 = sbr.rel (%p315) target = $region52
        $region51: #{tpu_custom_call.1} parent=39 // pred_region
          %318 = dma.done [#allocation6], 144
        $region52: #{tpu_custom_call.1} parent=39 // pred_fallthru
          _
        // Predicated region
        $region53: #{tpu_custom_call.1} parent=39 // pred_check
          %p319 = pneg %p135
        $region54: #{tpu_custom_call.1} parent=39 // pred_check_branch
          %321 = sbr.rel (%p319) target = $region56
        $region55: #{tpu_custom_call.1} parent=39 // pred_region
          %322 = dma.done [#allocation9], 1024
        $region56: #{tpu_custom_call.1} parent=39 // pred_fallthru
          _
        %s323 = sand.u32 %s48, 1
        %s324 = scalar_lea.sflag [#allocation3], %s323
        %s325 = sand.u32 %s48, 1
        %s326 = smul.addr %s325, 96
        %s327 = scalar_lea.vmem [#allocation2], %s326
        %p328 = pneg %p61
        %p329 = pneg %p58
        %s330 = sand.u32 %s26, 1
        %s331 = scalar_lea.sflag [#allocation6], %s330
        %s332 = sand.u32 %s80, 1
        %s333 = smul.addr %s332, 24
        %s334 = scalar_lea.vmem [#allocation5], %s333
        %p335 = pneg %p93
        %p336 = pneg %p90
        %p337 = pneg %p114
        %p338 = pneg %p111
        %p339 = pneg %p135
        %p340 = pneg %p132
        %p341 = pneg %p156
        %p342 = pneg %p153
        %p343 = pneg %p184
        %p344 = pneg %p181
        %s345 = sand.u32 %s171, 1
        %s346 = scalar_lea.sflag [#allocation4], %s345
        %s347 = sand.u32 %s171, 1
        %s348 = smul.addr %s347, 128
        %s349 = scalar_lea.vmem [#allocation10], %s348
        %s350 = smul.u32 8, %s31
        %s351 = ssub.s32 18, %s350
        %p352 = scmp.lt.s32.totalorder %s351, 8
        %s353 = scalar_select %p352, %s351, 8
        %s354 = smul.u32 64, %s353
        %s355 = smul.u32 %s354, 3
        %s356 = sadd.s32 %s31, 1
        %s357 = smul.u32 %s356, 4
        %s358 = smul.u32 2, %s357
        %s359 = smul.u32 8, %s31
        %v361 = vld [vmem:[%s301] sm:$0xf]
        %v362 = vld [vmem:[%s301 + $0x4] sm:$0xf]
        %v363 = vld [vmem:[%s301 + $0x8] sm:$0xf]
        %v364 = vld [vmem:[%s301 + $0xc] sm:$0xf]
        %v365 = vld [vmem:[%s301 + $0x10] sm:$0xf]
        %v366 = vld [vmem:[%s301 + $0x14] sm:$0xf]
        %v367 = vld [vmem:[%s301 + $0x18] sm:$0xf]
        %v368 = vld [vmem:[%s301 + $0x1c] sm:$0xf]
        %v369 = vld [vmem:[%s301 + $0x20] sm:$0xf]
        %v370 = vld [vmem:[%s301 + $0x24] sm:$0xf]
        %v371 = vld [vmem:[%s301 + $0x28] sm:$0xf]
        %v372 = vld [vmem:[%s301 + $0x2c] sm:$0xf]
        %v373 = vld [vmem:[%s301 + $0x30] sm:$0xf]
        %v374 = vld [vmem:[%s301 + $0x34] sm:$0xf]
        %v375 = vld [vmem:[%s301 + $0x38] sm:$0xf]
        %v376 = vld [vmem:[%s301 + $0x3c] sm:$0xf]
        %v377 = vld [vmem:[%s301 + $0x40] sm:$0xf]
        %v378 = vld [vmem:[%s301 + $0x44] sm:$0xf]
        %v379 = vld [vmem:[%s301 + $0x48] sm:$0xf]
        %v380 = vld [vmem:[%s301 + $0x4c] sm:$0xf]
        %v381 = vld [vmem:[%s301 + $0x50] sm:$0xf]
        %v382 = vld [vmem:[%s301 + $0x54] sm:$0xf]
        %v383 = vld [vmem:[%s301 + $0x58] sm:$0xf]
        %v384 = vld [vmem:[%s301 + $0x5c] sm:$0xf]
        %v385 = vmax.bf16 %v361, 0
        %v386 = vmax.bf16 %v362, 0
        %v387 = vmax.bf16 %v363, 0
        %v388 = vmax.bf16 %v364, 0
        %v389 = vmax.bf16 %v365, 0
        %v390 = vmax.bf16 %v366, 0
        %v391 = vmax.bf16 %v367, 0
        %v392 = vmax.bf16 %v368, 0
        %v393 = vmax.bf16 %v369, 0
        %v394 = vmax.bf16 %v370, 0
        %v395 = vmax.bf16 %v371, 0
        %v396 = vmax.bf16 %v372, 0
        %v397 = vmax.bf16 %v373, 0
        %v398 = vmax.bf16 %v374, 0
        %v399 = vmax.bf16 %v375, 0
        %v400 = vmax.bf16 %v376, 0
        %v401 = vmax.bf16 %v377, 0
        %v402 = vmax.bf16 %v378, 0
        %v403 = vmax.bf16 %v379, 0
        %v404 = vmax.bf16 %v380, 0
        %v405 = vmax.bf16 %v381, 0
        %v406 = vmax.bf16 %v382, 0
        %v407 = vmax.bf16 %v383, 0
        %v408 = vmax.bf16 %v384, 0
        %v409 = vunpack.c.l.bf16 %v385
        %v410 = vunpack.c.l.bf16 %v386
        %v411 = vunpack.c.l.bf16 %v387
        %v412 = vunpack.c.l.bf16 %v388
        %v413 = vunpack.c.l.bf16 %v389
        %v414 = vunpack.c.l.bf16 %v390
        %v415 = vunpack.c.l.bf16 %v391
        %v416 = vunpack.c.l.bf16 %v392
        %v417 = vunpack.c.l.bf16 %v393
        %v418 = vunpack.c.l.bf16 %v394
        %v419 = vunpack.c.l.bf16 %v395
        %v420 = vunpack.c.l.bf16 %v396
        %v421 = vunpack.c.l.bf16 %v397
        %v422 = vunpack.c.l.bf16 %v398
        %v423 = vunpack.c.l.bf16 %v399
        %v424 = vunpack.c.l.bf16 %v400
        %v425 = vunpack.c.l.bf16 %v401
        %v426 = vunpack.c.l.bf16 %v402
        %v427 = vunpack.c.l.bf16 %v403
        %v428 = vunpack.c.l.bf16 %v404
        %v429 = vunpack.c.l.bf16 %v405
        %v430 = vunpack.c.l.bf16 %v406
        %v431 = vunpack.c.l.bf16 %v407
        %v432 = vunpack.c.l.bf16 %v408
        %v433 = vld [vmem:[%s310] sm:$0xf]
        %v434 = vld [vmem:[%s310 + $0x4] sm:$0xf]
        %v435 = vld [vmem:[%s310 + $0x8] sm:$0xf]
        %v436 = vld [vmem:[%s310 + $0xc] sm:$0xf]
        %v437 = vld [vmem:[%s310 + $0x10] sm:$0xf]
        %v438 = vld [vmem:[%s310 + $0x14] sm:$0xf]
        %v439 = vmax.bf16 %v433, 0
        %v440 = vmax.bf16 %v434, 0
        %v441 = vmax.bf16 %v435, 0
        %v442 = vmax.bf16 %v436, 0
        %v443 = vmax.bf16 %v437, 0
        %v444 = vmax.bf16 %v438, 0
        %v445 = vunpack.c.l.bf16 %v439
        %v446 = vunpack.c.l.bf16 %v440
        %v447 = vunpack.c.l.bf16 %v441
        %v448 = vunpack.c.l.bf16 %v442
        %v449 = vunpack.c.l.bf16 %v443
        %v450 = vunpack.c.l.bf16 %v444
        %v451 = vld [vmem:[#allocation7] sm:$0x1]
        %v453 = vlaneseq
        %v454 = vshrl.u32 %v453, 7
        %v455 = vsub.s32 0, %v454
        %v456 = vrot.slane %v451, %v455
        %v458 = vmul.f32 %v409, %v456
        %v459 = vmul.f32 %v410, %v456
        %v460 = vmul.f32 %v412, %v456
        %v461 = vmul.f32 %v413, %v456
        %v462 = vmul.f32 %v415, %v456
        %v463 = vmul.f32 %v416, %v456
        %v464 = vmul.f32 %v418, %v456
        %v465 = vmul.f32 %v419, %v456
        %v466 = vmul.f32 %v421, %v456
        %v467 = vmul.f32 %v422, %v456
        %v468 = vmul.f32 %v424, %v456
        %v469 = vmul.f32 %v425, %v456
        %v470 = vmul.f32 %v427, %v456
        %v471 = vmul.f32 %v428, %v456
        %v472 = vmul.f32 %v430, %v456
        %v473 = vmul.f32 %v431, %v456
        %s474 = scalar_lea.vmem [#allocation7], 3
        %v475 = vld [vmem:[%s474] sm:$0x1]
        %v477 = vlaneseq
        %v478 = vshrl.u32 %v477, 7
        %v479 = vsub.s32 0, %v478
        %v480 = vrot.slane %v475, %v479
        %v482 = vmul.f32 %v412, %v480
        %v483 = vmul.f32 %v413, %v480
        %v484 = vmul.f32 %v415, %v480
        %v485 = vmul.f32 %v416, %v480
        %v486 = vmul.f32 %v418, %v480
        %v487 = vmul.f32 %v419, %v480
        %v488 = vmul.f32 %v421, %v480
        %v489 = vmul.f32 %v422, %v480
        %v490 = vmul.f32 %v424, %v480
        %v491 = vmul.f32 %v425, %v480
        %v492 = vmul.f32 %v427, %v480
        %v493 = vmul.f32 %v428, %v480
        %v494 = vmul.f32 %v430, %v480
        %v495 = vmul.f32 %v431, %v480
        %v496 = vmul.f32 %v445, %v480
        %v497 = vmul.f32 %v446, %v480
        %v498 = vadd.f32 %v458, %v482
        %v499 = vadd.f32 %v459, %v483
        %v500 = vadd.f32 %v460, %v484
        %v501 = vadd.f32 %v461, %v485
        %v502 = vadd.f32 %v462, %v486
        %v503 = vadd.f32 %v463, %v487
        %v504 = vadd.f32 %v464, %v488
        %v505 = vadd.f32 %v465, %v489
        %v506 = vadd.f32 %v466, %v490
        %v507 = vadd.f32 %v467, %v491
        %v508 = vadd.f32 %v468, %v492
        %v509 = vadd.f32 %v469, %v493
        %v510 = vadd.f32 %v470, %v494
        %v511 = vadd.f32 %v471, %v495
        %v512 = vadd.f32 %v472, %v496
        %v513 = vadd.f32 %v473, %v497
        %s514 = scalar_lea.vmem [#allocation7], 6
        %v515 = vld [vmem:[%s514] sm:$0x1]
        %v517 = vlaneseq
        %v518 = vshrl.u32 %v517, 7
        %v519 = vsub.s32 0, %v518
        %v520 = vrot.slane %v515, %v519
        %v522 = vmul.f32 %v415, %v520
        %v523 = vmul.f32 %v416, %v520
        %v524 = vmul.f32 %v418, %v520
        %v525 = vmul.f32 %v419, %v520
        %v526 = vmul.f32 %v421, %v520
        %v527 = vmul.f32 %v422, %v520
        %v528 = vmul.f32 %v424, %v520
        %v529 = vmul.f32 %v425, %v520
        %v530 = vmul.f32 %v427, %v520
        %v531 = vmul.f32 %v428, %v520
        %v532 = vmul.f32 %v430, %v520
        %v533 = vmul.f32 %v431, %v520
        %v534 = vmul.f32 %v445, %v520
        %v535 = vmul.f32 %v446, %v520
        %v536 = vmul.f32 %v448, %v520
        %v537 = vmul.f32 %v449, %v520
        %v538 = vadd.f32 %v498, %v522
        %v539 = vadd.f32 %v499, %v523
        %v540 = vadd.f32 %v500, %v524
        %v541 = vadd.f32 %v501, %v525
        %v542 = vadd.f32 %v502, %v526
        %v543 = vadd.f32 %v503, %v527
        %v544 = vadd.f32 %v504, %v528
        %v545 = vadd.f32 %v505, %v529
        %v546 = vadd.f32 %v506, %v530
        %v547 = vadd.f32 %v507, %v531
        %v548 = vadd.f32 %v508, %v532
        %v549 = vadd.f32 %v509, %v533
        %v550 = vadd.f32 %v510, %v534
        %v551 = vadd.f32 %v511, %v535
        %v552 = vadd.f32 %v512, %v536
        %v553 = vadd.f32 %v513, %v537
        %s554 = scalar_lea.vmem [#allocation7], 1
        %v555 = vld [vmem:[%s554] sm:$0x1]
        %v557 = vlaneseq
        %v558 = vshrl.u32 %v557, 7
        %v559 = vsub.s32 0, %v558
        %v560 = vrot.slane %v555, %v559
        %v562 = vmul.f32 %v409, %v560
        %v563 = vmul.f32 %v410, %v560
        %v564 = vmul.f32 %v411, %v560
        %v565 = vmul.f32 %v412, %v560
        %v566 = vmul.f32 %v413, %v560
        %v567 = vmul.f32 %v414, %v560
        %v568 = vmul.f32 %v415, %v560
        %v569 = vmul.f32 %v416, %v560
        %v570 = vmul.f32 %v417, %v560
        %v571 = vmul.f32 %v418, %v560
        %v572 = vmul.f32 %v419, %v560
        %v573 = vmul.f32 %v420, %v560
        %v574 = vmul.f32 %v421, %v560
        %v575 = vmul.f32 %v422, %v560
        %v576 = vmul.f32 %v423, %v560
        %v577 = vmul.f32 %v424, %v560
        %v578 = vmul.f32 %v425, %v560
        %v579 = vmul.f32 %v426, %v560
        %v580 = vmul.f32 %v427, %v560
        %v581 = vmul.f32 %v428, %v560
        %v582 = vmul.f32 %v429, %v560
        %v583 = vmul.f32 %v430, %v560
        %v584 = vmul.f32 %v431, %v560
        %v585 = vmul.f32 %v432, %v560
        %s586 = scalar_lea.vmem [#allocation7], 4
        %v587 = vld [vmem:[%s586] sm:$0x1]
        %v589 = vlaneseq
        %v590 = vshrl.u32 %v589, 7
        %v591 = vsub.s32 0, %v590
        %v592 = vrot.slane %v587, %v591
        %v594 = vmul.f32 %v412, %v592
        %v595 = vmul.f32 %v413, %v592
        %v596 = vmul.f32 %v414, %v592
        %v597 = vmul.f32 %v415, %v592
        %v598 = vmul.f32 %v416, %v592
        %v599 = vmul.f32 %v417, %v592
        %v600 = vmul.f32 %v418, %v592
        %v601 = vmul.f32 %v419, %v592
        %v602 = vmul.f32 %v420, %v592
        %v603 = vmul.f32 %v421, %v592
        %v604 = vmul.f32 %v422, %v592
        %v605 = vmul.f32 %v423, %v592
        %v606 = vmul.f32 %v424, %v592
        %v607 = vmul.f32 %v425, %v592
        %v608 = vmul.f32 %v426, %v592
        %v609 = vmul.f32 %v427, %v592
        %v610 = vmul.f32 %v428, %v592
        %v611 = vmul.f32 %v429, %v592
        %v612 = vmul.f32 %v430, %v592
        %v613 = vmul.f32 %v431, %v592
        %v614 = vmul.f32 %v432, %v592
        %v615 = vmul.f32 %v445, %v592
        %v616 = vmul.f32 %v446, %v592
        %v617 = vmul.f32 %v447, %v592
        %v618 = vadd.f32 %v562, %v594
        %v619 = vadd.f32 %v563, %v595
        %v620 = vadd.f32 %v564, %v596
        %v621 = vadd.f32 %v565, %v597
        %v622 = vadd.f32 %v566, %v598
        %v623 = vadd.f32 %v567, %v599
        %v624 = vadd.f32 %v568, %v600
        %v625 = vadd.f32 %v569, %v601
        %v626 = vadd.f32 %v570, %v602
        %v627 = vadd.f32 %v571, %v603
        %v628 = vadd.f32 %v572, %v604
        %v629 = vadd.f32 %v573, %v605
        %v630 = vadd.f32 %v574, %v606
        %v631 = vadd.f32 %v575, %v607
        %v632 = vadd.f32 %v576, %v608
        %v633 = vadd.f32 %v577, %v609
        %v634 = vadd.f32 %v578, %v610
        %v635 = vadd.f32 %v579, %v611
        %v636 = vadd.f32 %v580, %v612
        %v637 = vadd.f32 %v581, %v613
        %v638 = vadd.f32 %v582, %v614
        %v639 = vadd.f32 %v583, %v615
        %v640 = vadd.f32 %v584, %v616
        %v641 = vadd.f32 %v585, %v617
        %s642 = scalar_lea.vmem [#allocation7], 7
        %v643 = vld [vmem:[%s642] sm:$0x1]
        %v645 = vlaneseq
        %v646 = vshrl.u32 %v645, 7
        %v647 = vsub.s32 0, %v646
        %v648 = vrot.slane %v643, %v647
        %v650 = vmul.f32 %v415, %v648
        %v651 = vmul.f32 %v416, %v648
        %v652 = vmul.f32 %v417, %v648
        %v653 = vmul.f32 %v418, %v648
        %v654 = vmul.f32 %v419, %v648
        %v655 = vmul.f32 %v420, %v648
        %v656 = vmul.f32 %v421, %v648
        %v657 = vmul.f32 %v422, %v648
        %v658 = vmul.f32 %v423, %v648
        %v659 = vmul.f32 %v424, %v648
        %v660 = vmul.f32 %v425, %v648
        %v661 = vmul.f32 %v426, %v648
        %v662 = vmul.f32 %v427, %v648
        %v663 = vmul.f32 %v428, %v648
        %v664 = vmul.f32 %v429, %v648
        %v665 = vmul.f32 %v430, %v648
        %v666 = vmul.f32 %v431, %v648
        %v667 = vmul.f32 %v432, %v648
        %v668 = vmul.f32 %v445, %v648
        %v669 = vmul.f32 %v446, %v648
        %v670 = vmul.f32 %v447, %v648
        %v671 = vmul.f32 %v448, %v648
        %v672 = vmul.f32 %v449, %v648
        %v673 = vmul.f32 %v450, %v648
        %v674 = vadd.f32 %v618, %v650
        %v675 = vadd.f32 %v619, %v651
        %v676 = vadd.f32 %v620, %v652
        %v677 = vadd.f32 %v621, %v653
        %v678 = vadd.f32 %v622, %v654
        %v679 = vadd.f32 %v623, %v655
        %v680 = vadd.f32 %v624, %v656
        %v681 = vadd.f32 %v625, %v657
        %v682 = vadd.f32 %v626, %v658
        %v683 = vadd.f32 %v627, %v659
        %v684 = vadd.f32 %v628, %v660
        %v685 = vadd.f32 %v629, %v661
        %v686 = vadd.f32 %v630, %v662
        %v687 = vadd.f32 %v631, %v663
        %v688 = vadd.f32 %v632, %v664
        %v689 = vadd.f32 %v633, %v665
        %v690 = vadd.f32 %v634, %v666
        %v691 = vadd.f32 %v635, %v667
        %v692 = vadd.f32 %v636, %v668
        %v693 = vadd.f32 %v637, %v669
        %v694 = vadd.f32 %v638, %v670
        %v695 = vadd.f32 %v639, %v671
        %v696 = vadd.f32 %v640, %v672
        %v697 = vadd.f32 %v641, %v673
        %vm722 = vcmask 1046528
        %v723 = vrot.slane %v674, 1
        %v724 = vrot.slane %v675, 1
        %v725 = vsel %vm722, %v723, %v724
        %v726 = vrot.slane %v676, 1
        %v727 = vsel %vm722, %v724, %v726
        %v728 = vrot.slane %v677, 1
        %v729 = vrot.slane %v678, 1
        %v730 = vsel %vm722, %v728, %v729
        %v731 = vrot.slane %v679, 1
        %v732 = vsel %vm722, %v729, %v731
        %v733 = vrot.slane %v680, 1
        %v734 = vrot.slane %v681, 1
        %v735 = vsel %vm722, %v733, %v734
        %v736 = vrot.slane %v682, 1
        %v737 = vsel %vm722, %v734, %v736
        %v738 = vrot.slane %v683, 1
        %v739 = vrot.slane %v684, 1
        %v740 = vsel %vm722, %v738, %v739
        %v741 = vrot.slane %v685, 1
        %v742 = vsel %vm722, %v739, %v741
        %v743 = vrot.slane %v686, 1
        %v744 = vrot.slane %v687, 1
        %v745 = vsel %vm722, %v743, %v744
        %v746 = vrot.slane %v688, 1
        %v747 = vsel %vm722, %v744, %v746
        %v748 = vrot.slane %v689, 1
        %v749 = vrot.slane %v690, 1
        %v750 = vsel %vm722, %v748, %v749
        %v751 = vrot.slane %v691, 1
        %v752 = vsel %vm722, %v749, %v751
        %v753 = vrot.slane %v692, 1
        %v754 = vrot.slane %v693, 1
        %v755 = vsel %vm722, %v753, %v754
        %v756 = vrot.slane %v694, 1
        %v757 = vsel %vm722, %v754, %v756
        %v758 = vrot.slane %v695, 1
        %v759 = vrot.slane %v696, 1
        %v760 = vsel %vm722, %v758, %v759
        %v761 = vrot.slane %v697, 1
        %v762 = vsel %vm722, %v759, %v761
        %v779 = vadd.f32 %v538, %v725
        %v780 = vadd.f32 %v539, %v727
        %v781 = vadd.f32 %v540, %v730
        %v782 = vadd.f32 %v541, %v732
        %v783 = vadd.f32 %v542, %v735
        %v784 = vadd.f32 %v543, %v737
        %v785 = vadd.f32 %v544, %v740
        %v786 = vadd.f32 %v545, %v742
        %v787 = vadd.f32 %v546, %v745
        %v788 = vadd.f32 %v547, %v747
        %v789 = vadd.f32 %v548, %v750
        %v790 = vadd.f32 %v549, %v752
        %v791 = vadd.f32 %v550, %v755
        %v792 = vadd.f32 %v551, %v757
        %v793 = vadd.f32 %v552, %v760
        %v794 = vadd.f32 %v553, %v762
        %s795 = scalar_lea.vmem [#allocation7], 2
        %v796 = vld [vmem:[%s795] sm:$0x1]
        %v798 = vlaneseq
        %v799 = vshrl.u32 %v798, 7
        %v800 = vsub.s32 0, %v799
        %v801 = vrot.slane %v796, %v800
        %v803 = vmul.f32 %v409, %v801
        %v804 = vmul.f32 %v410, %v801
        %v805 = vmul.f32 %v411, %v801
        %v806 = vmul.f32 %v412, %v801
        %v807 = vmul.f32 %v413, %v801
        %v808 = vmul.f32 %v414, %v801
        %v809 = vmul.f32 %v415, %v801
        %v810 = vmul.f32 %v416, %v801
        %v811 = vmul.f32 %v417, %v801
        %v812 = vmul.f32 %v418, %v801
        %v813 = vmul.f32 %v419, %v801
        %v814 = vmul.f32 %v420, %v801
        %v815 = vmul.f32 %v421, %v801
        %v816 = vmul.f32 %v422, %v801
        %v817 = vmul.f32 %v423, %v801
        %v818 = vmul.f32 %v424, %v801
        %v819 = vmul.f32 %v425, %v801
        %v820 = vmul.f32 %v426, %v801
        %v821 = vmul.f32 %v427, %v801
        %v822 = vmul.f32 %v428, %v801
        %v823 = vmul.f32 %v429, %v801
        %v824 = vmul.f32 %v430, %v801
        %v825 = vmul.f32 %v431, %v801
        %v826 = vmul.f32 %v432, %v801
        %s827 = scalar_lea.vmem [#allocation7], 5
        %v828 = vld [vmem:[%s827] sm:$0x1]
        %v830 = vlaneseq
        %v831 = vshrl.u32 %v830, 7
        %v832 = vsub.s32 0, %v831
        %v833 = vrot.slane %v828, %v832
        %v835 = vmul.f32 %v412, %v833
        %v836 = vmul.f32 %v413, %v833
        %v837 = vmul.f32 %v414, %v833
        %v838 = vmul.f32 %v415, %v833
        %v839 = vmul.f32 %v416, %v833
        %v840 = vmul.f32 %v417, %v833
        %v841 = vmul.f32 %v418, %v833
        %v842 = vmul.f32 %v419, %v833
        %v843 = vmul.f32 %v420, %v833
        %v844 = vmul.f32 %v421, %v833
        %v845 = vmul.f32 %v422, %v833
        %v846 = vmul.f32 %v423, %v833
        %v847 = vmul.f32 %v424, %v833
        %v848 = vmul.f32 %v425, %v833
        %v849 = vmul.f32 %v426, %v833
        %v850 = vmul.f32 %v427, %v833
        %v851 = vmul.f32 %v428, %v833
        %v852 = vmul.f32 %v429, %v833
        %v853 = vmul.f32 %v430, %v833
        %v854 = vmul.f32 %v431, %v833
        %v855 = vmul.f32 %v432, %v833
        %v856 = vmul.f32 %v445, %v833
        %v857 = vmul.f32 %v446, %v833
        %v858 = vmul.f32 %v447, %v833
        %v859 = vadd.f32 %v803, %v835
        %v860 = vadd.f32 %v804, %v836
        %v861 = vadd.f32 %v805, %v837
        %v862 = vadd.f32 %v806, %v838
        %v863 = vadd.f32 %v807, %v839
        %v864 = vadd.f32 %v808, %v840
        %v865 = vadd.f32 %v809, %v841
        %v866 = vadd.f32 %v810, %v842
        %v867 = vadd.f32 %v811, %v843
        %v868 = vadd.f32 %v812, %v844
        %v869 = vadd.f32 %v813, %v845
        %v870 = vadd.f32 %v814, %v846
        %v871 = vadd.f32 %v815, %v847
        %v872 = vadd.f32 %v816, %v848
        %v873 = vadd.f32 %v817, %v849
        %v874 = vadd.f32 %v818, %v850
        %v875 = vadd.f32 %v819, %v851
        %v876 = vadd.f32 %v820, %v852
        %v877 = vadd.f32 %v821, %v853
        %v878 = vadd.f32 %v822, %v854
        %v879 = vadd.f32 %v823, %v855
        %v880 = vadd.f32 %v824, %v856
        %v881 = vadd.f32 %v825, %v857
        %v882 = vadd.f32 %v826, %v858
        %s883 = scalar_lea.vmem [#allocation7], 8
        %v884 = vld [vmem:[%s883] sm:$0x1]
        %v886 = vlaneseq
        %v887 = vshrl.u32 %v886, 7
        %v888 = vsub.s32 0, %v887
        %v889 = vrot.slane %v884, %v888
        %v891 = vmul.f32 %v415, %v889
        %v892 = vmul.f32 %v416, %v889
        %v893 = vmul.f32 %v417, %v889
        %v894 = vmul.f32 %v418, %v889
        %v895 = vmul.f32 %v419, %v889
        %v896 = vmul.f32 %v420, %v889
        %v897 = vmul.f32 %v421, %v889
        %v898 = vmul.f32 %v422, %v889
        %v899 = vmul.f32 %v423, %v889
        %v900 = vmul.f32 %v424, %v889
        %v901 = vmul.f32 %v425, %v889
        %v902 = vmul.f32 %v426, %v889
        %v903 = vmul.f32 %v427, %v889
        %v904 = vmul.f32 %v428, %v889
        %v905 = vmul.f32 %v429, %v889
        %v906 = vmul.f32 %v430, %v889
        %v907 = vmul.f32 %v431, %v889
        %v908 = vmul.f32 %v432, %v889
        %v909 = vmul.f32 %v445, %v889
        %v910 = vmul.f32 %v446, %v889
        %v911 = vmul.f32 %v447, %v889
        %v912 = vmul.f32 %v448, %v889
        %v913 = vmul.f32 %v449, %v889
        %v914 = vmul.f32 %v450, %v889
        %v915 = vadd.f32 %v859, %v891
        %v916 = vadd.f32 %v860, %v892
        %v917 = vadd.f32 %v861, %v893
        %v918 = vadd.f32 %v862, %v894
        %v919 = vadd.f32 %v863, %v895
        %v920 = vadd.f32 %v864, %v896
        %v921 = vadd.f32 %v865, %v897
        %v922 = vadd.f32 %v866, %v898
        %v923 = vadd.f32 %v867, %v899
        %v924 = vadd.f32 %v868, %v900
        %v925 = vadd.f32 %v869, %v901
        %v926 = vadd.f32 %v870, %v902
        %v927 = vadd.f32 %v871, %v903
        %v928 = vadd.f32 %v872, %v904
        %v929 = vadd.f32 %v873, %v905
        %v930 = vadd.f32 %v874, %v906
        %v931 = vadd.f32 %v875, %v907
        %v932 = vadd.f32 %v876, %v908
        %v933 = vadd.f32 %v877, %v909
        %v934 = vadd.f32 %v878, %v910
        %v935 = vadd.f32 %v879, %v911
        %v936 = vadd.f32 %v880, %v912
        %v937 = vadd.f32 %v881, %v913
        %v938 = vadd.f32 %v882, %v914
        %vm963 = vcmask 1045504
        %v964 = vrot.slane %v915, 2
        %v965 = vrot.slane %v916, 2
        %v966 = vsel %vm963, %v964, %v965
        %v967 = vrot.slane %v917, 2
        %v968 = vsel %vm963, %v965, %v967
        %v969 = vrot.slane %v918, 2
        %v970 = vrot.slane %v919, 2
        %v971 = vsel %vm963, %v969, %v970
        %v972 = vrot.slane %v920, 2
        %v973 = vsel %vm963, %v970, %v972
        %v974 = vrot.slane %v921, 2
        %v975 = vrot.slane %v922, 2
        %v976 = vsel %vm963, %v974, %v975
        %v977 = vrot.slane %v923, 2
        %v978 = vsel %vm963, %v975, %v977
        %v979 = vrot.slane %v924, 2
        %v980 = vrot.slane %v925, 2
        %v981 = vsel %vm963, %v979, %v980
        %v982 = vrot.slane %v926, 2
        %v983 = vsel %vm963, %v980, %v982
        %v984 = vrot.slane %v927, 2
        %v985 = vrot.slane %v928, 2
        %v986 = vsel %vm963, %v984, %v985
        %v987 = vrot.slane %v929, 2
        %v988 = vsel %vm963, %v985, %v987
        %v989 = vrot.slane %v930, 2
        %v990 = vrot.slane %v931, 2
        %v991 = vsel %vm963, %v989, %v990
        %v992 = vrot.slane %v932, 2
        %v993 = vsel %vm963, %v990, %v992
        %v994 = vrot.slane %v933, 2
        %v995 = vrot.slane %v934, 2
        %v996 = vsel %vm963, %v994, %v995
        %v997 = vrot.slane %v935, 2
        %v998 = vsel %vm963, %v995, %v997
        %v999 = vrot.slane %v936, 2
        %v1000 = vrot.slane %v937, 2
        %v1001 = vsel %vm963, %v999, %v1000
        %v1002 = vrot.slane %v938, 2
        %v1003 = vsel %vm963, %v1000, %v1002
        %v1020 = vadd.f32 %v779, %v966
        %v1021 = vadd.f32 %v780, %v968
        %v1022 = vadd.f32 %v781, %v971
        %v1023 = vadd.f32 %v782, %v973
        %v1024 = vadd.f32 %v783, %v976
        %v1025 = vadd.f32 %v784, %v978
        %v1026 = vadd.f32 %v785, %v981
        %v1027 = vadd.f32 %v786, %v983
        %v1028 = vadd.f32 %v787, %v986
        %v1029 = vadd.f32 %v788, %v988
        %v1030 = vadd.f32 %v789, %v991
        %v1031 = vadd.f32 %v790, %v993
        %v1032 = vadd.f32 %v791, %v996
        %v1033 = vadd.f32 %v792, %v998
        %v1034 = vadd.f32 %v793, %v1001
        %v1035 = vadd.f32 %v794, %v1003
        %v1036 = vpack.c.bf16 %v1021, %v1020
        %v1037 = vpack.c.bf16 %v1023, %v1022
        %v1038 = vpack.c.bf16 %v1025, %v1024
        %v1039 = vpack.c.bf16 %v1027, %v1026
        %v1040 = vpack.c.bf16 %v1029, %v1028
        %v1041 = vpack.c.bf16 %v1031, %v1030
        %v1042 = vpack.c.bf16 %v1033, %v1032
        %v1043 = vpack.c.bf16 %v1035, %v1034
        %v1044 = vld [vmem:[#allocation8] sm:$0xf]
        %v1045 = vld [vmem:[#allocation8 + $0x4] sm:$0xf]
        %v1046 = vld [vmem:[#allocation8 + $0x8] sm:$0xf]
        %v1047 = vld [vmem:[#allocation8 + $0xc] sm:$0xf]
        %v1048 = vld [vmem:[#allocation8 + $0x10] sm:$0xf]
        %v1049 = vld [vmem:[#allocation8 + $0x14] sm:$0xf]
        %v1050 = vld [vmem:[#allocation8 + $0x18] sm:$0xf]
        %v1051 = vld [vmem:[#allocation8 + $0x1c] sm:$0xf]
        %v1052 = vld [vmem:[#allocation8 + $0x20] sm:$0xf]
        %v1053 = vld [vmem:[#allocation8 + $0x24] sm:$0xf]
        %v1054 = vld [vmem:[#allocation8 + $0x28] sm:$0xf]
        %v1055 = vld [vmem:[#allocation8 + $0x2c] sm:$0xf]
        %v1056 = vld [vmem:[#allocation8 + $0x30] sm:$0xf]
        %v1057 = vld [vmem:[#allocation8 + $0x34] sm:$0xf]
        %v1058 = vld [vmem:[#allocation8 + $0x38] sm:$0xf]
        %v1059 = vld [vmem:[#allocation8 + $0x3c] sm:$0xf]
        %v1060 = vld [vmem:[%s4] sm:$0x1]
        %v1062 = vlaneseq
        %v1063 = vshrl.u32 %v1062, 7
        %v1064 = vsub.s32 0, %v1063
        %v1065 = vrot.slane %v1060, %v1064
        %v1083 = vunpack.c.l.b16 %v1044
        %v1084 = vunpack.c.l.b16 %v1045
        %v1085 = vunpack.c.l.b16 %v1046
        %v1086 = vunpack.c.l.b16 %v1047
        %v1087 = vunpack.c.l.b16 %v1048
        %v1088 = vunpack.c.l.b16 %v1049
        %v1089 = vunpack.c.l.b16 %v1050
        %v1090 = vunpack.c.l.b16 %v1051
        %v1091 = vunpack.c.l.b16 %v1052
        %v1092 = vunpack.c.l.b16 %v1053
        %v1093 = vunpack.c.l.b16 %v1054
        %v1094 = vunpack.c.l.b16 %v1055
        %v1095 = vunpack.c.l.b16 %v1056
        %v1096 = vunpack.c.l.b16 %v1057
        %v1097 = vunpack.c.l.b16 %v1058
        %v1098 = vunpack.c.l.b16 %v1059
        %v1099 = vpack.c.b16 %v1084, %v1083
        %v1100 = vpack.c.b16 %v1086, %v1085
        %v1101 = vpack.c.b16 %v1088, %v1087
        %v1102 = vpack.c.b16 %v1090, %v1089
        %v1103 = vpack.c.b16 %v1092, %v1091
        %v1104 = vpack.c.b16 %v1094, %v1093
        %v1105 = vpack.c.b16 %v1096, %v1095
        %v1106 = vpack.c.b16 %v1098, %v1097
        %1115 = vmatprep.subr.bf16.mxu0 0
        %1116 = vmatpush1.bf16.msra.mxu0 %v1106
        %1117 = vmatprep.subr.bf16.mxu0 0
        %1118 = vmatpush1.bf16.msra.mxu0 %v1105
        %1119 = vmatprep.subr.bf16.mxu0 0
        %1120 = vmatpush1.bf16.msra.mxu0 %v1104
        %1121 = vmatprep.subr.bf16.mxu0 0
        %1122 = vmatpush1.bf16.msra.mxu0 %v1103
        %1123 = vmatprep.subr.bf16.mxu0 0
        %1124 = vmatpush1.bf16.msra.mxu0 %v1102
        %1125 = vmatprep.subr.bf16.mxu0 0
        %1126 = vmatpush1.bf16.msra.mxu0 %v1101
        %1127 = vmatprep.subr.bf16.mxu0 0
        %1128 = vmatpush1.bf16.msra.mxu0 %v1100
        %1129 = vmatprep.subr.bf16.mxu0 0
        %1130 = vmatpush1.bf16.msra.mxu0 %v1099
        %1131 = vmatprep.subr.bf16.mxu0 0
        %1132 = vmatpush2.bf16.msra.mxu0 0
        %1133 = vmatprep.subr.bf16.mxu0 0
        %1134 = vmatpush2.bf16.msra.mxu0 0
        %1135 = vmatprep.subr.bf16.mxu0 0
        %1136 = vmatpush2.bf16.msra.mxu0 0
        %1137 = vmatprep.subr.bf16.mxu0 0
        %1138 = vmatpush2.bf16.msra.mxu0 0
        %1139 = vmatprep.subr.bf16.mxu0 0
        %1140 = vmatpush2.bf16.msra.mxu0 0
        %1141 = vmatprep.subr.bf16.mxu0 0
        %1142 = vmatpush2.bf16.msra.mxu0 0
        %1143 = vmatprep.subr.bf16.mxu0 0
        %1144 = vmatpush2.bf16.msra.mxu0 0
        %1145 = vmatprep.subr.bf16.mxu0 0
        %1146 = vmatpush2.bf16.msra.mxu0 0
        %1147 = vmatprep.mubr.bf16.mxu0 0
        %1148 = vmatmul.mubr.bf16.gmra.mxu0 %v1036
        %v1149 = vpop.f32.mrf.mxu0
        %v1150 = vadd.f32 %v1065, %v1149
        %v1151 = vpop.f32.mrf.mxu0
        %v1152 = vpop.f32.mrf.mxu0
        %v1153 = vadd.f32 %v1065, %v1152
        %v1154 = vpop.f32.mrf.mxu0
        %1155 = vmatprep.mubr.bf16.mxu0 0
        %1156 = vmatmul.mubr.bf16.gmra.mxu0 %v1037
        %v1157 = vpop.f32.mrf.mxu0
        %v1158 = vadd.f32 %v1065, %v1157
        %v1159 = vpop.f32.mrf.mxu0
        %v1160 = vpop.f32.mrf.mxu0
        %v1161 = vadd.f32 %v1065, %v1160
        %v1162 = vpop.f32.mrf.mxu0
        %1163 = vmatprep.mubr.bf16.mxu0 0
        %1164 = vmatmul.mubr.bf16.gmra.mxu0 %v1038
        %v1165 = vpop.f32.mrf.mxu0
        %v1166 = vadd.f32 %v1065, %v1165
        %v1167 = vpop.f32.mrf.mxu0
        %v1168 = vpop.f32.mrf.mxu0
        %v1169 = vadd.f32 %v1065, %v1168
        %v1170 = vpop.f32.mrf.mxu0
        %1171 = vmatprep.mubr.bf16.mxu0 0
        %1172 = vmatmul.mubr.bf16.gmra.mxu0 %v1039
        %v1173 = vpop.f32.mrf.mxu0
        %v1174 = vadd.f32 %v1065, %v1173
        %v1175 = vpop.f32.mrf.mxu0
        %v1176 = vpop.f32.mrf.mxu0
        %v1177 = vadd.f32 %v1065, %v1176
        %v1178 = vpop.f32.mrf.mxu0
        %1179 = vmatprep.mubr.bf16.mxu0 0
        %1180 = vmatmul.mubr.bf16.gmra.mxu0 %v1040
        %v1181 = vpop.f32.mrf.mxu0
        %v1182 = vadd.f32 %v1065, %v1181
        %v1183 = vpop.f32.mrf.mxu0
        %v1184 = vpop.f32.mrf.mxu0
        %v1185 = vadd.f32 %v1065, %v1184
        %v1186 = vpop.f32.mrf.mxu0
        %1187 = vmatprep.mubr.bf16.mxu0 0
        %1188 = vmatmul.mubr.bf16.gmra.mxu0 %v1041
        %v1189 = vpop.f32.mrf.mxu0
        %v1190 = vadd.f32 %v1065, %v1189
        %v1191 = vpop.f32.mrf.mxu0
        %v1192 = vpop.f32.mrf.mxu0
        %v1193 = vadd.f32 %v1065, %v1192
        %v1194 = vpop.f32.mrf.mxu0
        %1195 = vmatprep.mubr.bf16.mxu0 0
        %1196 = vmatmul.mubr.bf16.gmra.mxu0 %v1042
        %v1197 = vpop.f32.mrf.mxu0
        %v1198 = vadd.f32 %v1065, %v1197
        %v1199 = vpop.f32.mrf.mxu0
        %v1200 = vpop.f32.mrf.mxu0
        %v1201 = vadd.f32 %v1065, %v1200
        %v1202 = vpop.f32.mrf.mxu0
        %1203 = vmatprep.mubr.bf16.mxu0 0
        %1204 = vmatmul.mubr.bf16.gmra.mxu0 %v1043
        %v1205 = vpop.f32.mrf.mxu0
        %v1206 = vadd.f32 %v1065, %v1205
        %v1207 = vpop.f32.mrf.mxu0
        %v1208 = vpop.f32.mrf.mxu0
        %v1209 = vadd.f32 %v1065, %v1208
        %v1210 = vpop.f32.mrf.mxu0
        %1211 = vdwg.mxu0
        %1212 = vst [vmem:[%s349] sm:$0xff] %v1150
        %1213 = vst [vmem:[%s349 + $0x8] sm:$0xff] %v1153
        %1214 = vst [vmem:[%s349 + $0x10] sm:$0xff] %v1158
        %1215 = vst [vmem:[%s349 + $0x18] sm:$0xff] %v1161
        %1216 = vst [vmem:[%s349 + $0x20] sm:$0xff] %v1166
        %1217 = vst [vmem:[%s349 + $0x28] sm:$0xff] %v1169
        %1218 = vst [vmem:[%s349 + $0x30] sm:$0xff] %v1174
        %1219 = vst [vmem:[%s349 + $0x38] sm:$0xff] %v1177
        %1220 = vst [vmem:[%s349 + $0x40] sm:$0xff] %v1182
        %1221 = vst [vmem:[%s349 + $0x48] sm:$0xff] %v1185
        %1222 = vst [vmem:[%s349 + $0x50] sm:$0xff] %v1190
        %1223 = vst [vmem:[%s349 + $0x58] sm:$0xff] %v1193
        %1224 = vst [vmem:[%s349 + $0x60] sm:$0xff] %v1198
        %1225 = vst [vmem:[%s349 + $0x68] sm:$0xff] %v1201
        %1226 = vst [vmem:[%s349 + $0x70] sm:$0xff] %v1206
        %1227 = vst [vmem:[%s349 + $0x78] sm:$0xff] %v1209
        %s1228 = sand.u32 %s171, 1
        %s1229 = scalar_lea.sflag [#allocation4], %s1228
        %s1230 = sand.u32 %s171, 1
        %s1231 = smul.addr %s1230, 128
        %s1232 = scalar_lea.vmem [#allocation10], %s1231
        // Predicated region
        $region57: #{tpu_custom_call.1} parent=39 // pred_check
          %p1233 = pneg %p181
        $region58: #{tpu_custom_call.1} parent=39 // pred_check_branch
          %1235 = sbr.rel (%p1233) target = $region60
        $region59: #{tpu_custom_call.1} parent=39 // pred_region
          %s1236 = smul.u32 8, %s31
          %s1238 = ssub.s32 2048, 2048
          %1239 = vsyncadd %s1229, %s1238
          %s1240 = smul.addr %s1236, 2
          %s1241 = smul.addr %s30, 32
          %s1242 = sadd.s32 %s1240, %s1241
          %s1243 = smul.addr %s1242, 128
          %s1244 = scalar_lea.hbm %s5, %s1243
          %s1245 = sshll.u32 %s1232, 4
          %s1246 = int_to_ptr.vmem [resolvable:$true] %s1245
          %1251 = dma.vmem_to_hbm [thread:$0]  %s1246, 2048, %s1244, %s1229, 128, 128, 8
        $region60: #{tpu_custom_call.1} parent=39 // pred_fallthru
          _
      $region40: #{tpu_custom_call.1} parent=5 // pred_fallthru
        _
      %p1252 = scmp.le.s32.totalorder 2, %s21
      // Predicated region
      $region61: #{tpu_custom_call.1} parent=5 // pred_check
        %p1253 = pneg %p1252
      $region62: #{tpu_custom_call.1} parent=5 // pred_check_branch
        %1255 = sbr.rel (%p1253) target = $region64
      $region63: #{tpu_custom_call.1} parent=5 // pred_region
        %s1256 = ssub.s32 %s21, 2
        // Predicated region
        $region65: #{tpu_custom_call.1} parent=63 // pred_check
          %p1257 = pneg %p187
        $region66: #{tpu_custom_call.1} parent=63 // pred_check_branch
          %1259 = sbr.rel (%p1257) target = $region68
        $region67: #{tpu_custom_call.1} parent=63 // pred_region
          %s1260 = sand.u32 %s172, 1
          %s1261 = scalar_lea.sflag [#allocation4], %s1260
          %s1262 = sand.u32 %s172, 1
          %s1263 = smul.addr %s1262, 128
          %s1264 = scalar_lea.vmem [#allocation10], %s1263
          %1265 = dma.done %s1261, 2048
        $region68: #{tpu_custom_call.1} parent=63 // pred_fallthru
          _
      $region64: #{tpu_custom_call.1} parent=5 // pred_fallthru
        _
    $region6: #{tpu_custom_call.1} parent=1 // loop_footer
      %s25 = sadd.s32 1, %s21
    $region7: #{tpu_custom_call.1} parent=1 // loop_footer_branch
      %20 = sbr.rel target = $region3
    $region8: #{tpu_custom_call.1} parent=1 // loop_exit
      _
    %1266 = vsyncpa [#allocation3], 1
    %s1267 = scalar_lea.sflag [#allocation3], 1
    %1268 = vsyncpa %s1267, 1
    %1269 = vsyncpa [#allocation6], 1
    %s1270 = scalar_lea.sflag [#allocation6], 1
    %1271 = vsyncpa %s1270, 1
    %1272 = vsyncpa [#allocation9], 1
    %1273 = vsyncpa [#allocation4], 1
    %s1274 = scalar_lea.sflag [#allocation4], 1
    %1275 = vsyncpa %s1274, 1

</llo_original>
